<compile_context>
chip_gen: v7x
topology: tpu7x:2x2x1
jax: 0.10.0
libtpu: 0.0.40
codegen_flags: <defaults>
</compile_context>

<pallas_src>
import functools

import jax
import jax.numpy as jnp
from jax.experimental import pallas as pl
from jax.experimental.pallas import tpu as pltpu


# ----------------------------------------------------------------------------
# Kernels
# ----------------------------------------------------------------------------
def _layernorm1d_kernel(x_ref, gamma_ref, beta_ref, o_ref, *, n_features, eps):
    """Single-pass kernel: one (block_b, F) tile holds full feature rows."""
    x = x_ref[...].astype(jnp.float32)                        # (TB, F)
    mean = jnp.mean(x, axis=1, keepdims=True)                 # (TB, 1)
    diff = x - mean
    # torch.Tensor.std default is unbiased (Bessel's correction, N-1).
    var = jnp.sum(diff * diff, axis=1, keepdims=True) * (1.0 / (n_features - 1))
    std = jnp.sqrt(var)
    # Per-row (TB,1) reciprocal on the EUP instead of an F-wide divide.
    inv = pl.reciprocal(std + eps, approx=False)              # (TB, 1)
    gamma = gamma_ref[...].astype(jnp.float32)                # (1, F), VMEM-resident
    beta = beta_ref[...].astype(jnp.float32)                  # (1, F), VMEM-resident
    y = diff * inv * gamma + beta
    o_ref[...] = y.astype(o_ref.dtype)


def _stats_kernel(x_ref, mean_ref, rstd_ref, sum_ref, sumsq_ref,
                  *, n_features, eps, block_f):
    """Pass 1 of the feature-blocked path: per-row mean and 1/(std+eps)."""
    k = pl.program_id(1)

    @pl.when(k == 0)
    def _():
        sum_ref[...] = jnp.zeros_like(sum_ref)
        sumsq_ref[...] = jnp.zeros_like(sumsq_ref)

    x = x_ref[...].astype(jnp.float32)                        # (TB, TF)
    # Mask columns past F (padded lanes of the last feature tile hold garbage).
    col = jax.lax.broadcasted_iota(jnp.int32, x.shape, 1) + k * block_f
    x = jnp.where(col < n_features, x, 0.0)
    sum_ref[...] += jnp.sum(x, axis=1, keepdims=True)
    sumsq_ref[...] += jnp.sum(x * x, axis=1, keepdims=True)

    @pl.when(k == pl.num_programs(1) - 1)
    def _():
        mean = sum_ref[...] * (1.0 / n_features)
        var = (sumsq_ref[...] - n_features * mean * mean) * (1.0 / (n_features - 1))
        var = jnp.maximum(var, 0.0)
        mean_ref[...] = mean
        rstd_ref[...] = pl.reciprocal(jnp.sqrt(var) + eps, approx=False)


def _apply_kernel(x_ref, mean_ref, rstd_ref, gamma_ref, beta_ref, o_ref):
    """Pass 2 of the feature-blocked path: elementwise normalize."""
    x = x_ref[...].astype(jnp.float32)                        # (TB, TF)
    y = (x - mean_ref[...]) * rstd_ref[...]
    y = y * gamma_ref[...].astype(jnp.float32) + beta_ref[...].astype(jnp.float32)
    o_ref[...] = y.astype(o_ref.dtype)


# ----------------------------------------------------------------------------
# Tiling heuristics
# ----------------------------------------------------------------------------
def _min_sublane(itemsize):
    # Sub-32-bit dtypes pack along sublanes: 8 for f32, 16 for bf16, 32 for i8/fp8.
    return max(8, 32 // max(int(itemsize), 1))


def _vmem_budget():
    """(per-input-block budget bytes, scoped vmem_limit_bytes) per generation."""
    default_cap = 64 * 1024 * 1024   # assume the smallest (v7x per-TC) if unknown
    try:
        info = pltpu.get_tpu_info()
        vmem_cap = int(getattr(info, "vmem_capacity_bytes", default_cap))
    except Exception:
        vmem_cap = default_cap
    if vmem_cap >= 128 * 1024 * 1024:
        # v5e / v6e: 128 MiB physical VMEM -> ~8 MiB input blocks, 64 MiB scoped.
        return 8 * 1024 * 1024, 64 * 1024 * 1024
    # v7x: 64 MiB per TC -> ~6 MiB input blocks, keep 32 MiB scoped limit.
    return 6 * 1024 * 1024, 32 * 1024 * 1024


def _choose_blocks(B, F, itemsize, budget):
    """Pick (block_b, block_f). block_f < F only if a minimal full-F tile
    would not fit the budget (very wide features)."""
    align = _min_sublane(itemsize)
    width = max(int(itemsize), 4)            # f32 upcast dominates live width

    # Feature axis: keep full rows unless even `align` rows of full F blow budget.
    if align * F * width <= budget:
        block_f = F
    else:
        block_f = max(128, ((budget // (align * width)) // 128) * 128)
        block_f = min(block_f, F)

    # Batch axis: biggest byte-sized tile; keep the grid >= 2 when possible so
    # DMA/compute overlap survives and v7x's two TensorCores both get work.
    rows = budget // max(block_f * width, 1)
    rows = (rows // align) * align
    if rows < align:
        rows = align
    if rows >= B:
        if B >= 2 * align:
            rows = max(align, (B // 2 // align) * align)
        else:
            rows = B                          # tiny batch: full-dim block is legal
    return min(rows, B), block_f


# ----------------------------------------------------------------------------
# Public wrapper
# ----------------------------------------------------------------------------
def layernorm1d(x, gamma, beta, eps=1e-6, *, block_b=None, block_f=None):
    """x: (B, F), gamma/beta: (F,). Returns (B, F)."""
    B, F = x.shape
    assert F > 1, "unbiased std (N-1) is undefined for F == 1"
    itemsize = x.dtype.itemsize
    budget, vmem_limit = _vmem_budget()

    auto_b, auto_f = _choose_blocks(B, F, itemsize, budget)
    if block_b is None:
        block_b = auto_b
    if block_f is None:
        block_f = auto_f
    block_b = min(block_b, B)
    block_f = min(block_f, F)
    nb = pl.cdiv(B, block_b)

    gamma2d = gamma.reshape(1, F)
    beta2d = beta.reshape(1, F)
    io_bytes = x.dtype.itemsize

    if block_f >= F:
        # ------------------------- single-pass path -------------------------
        kernel = functools.partial(_layernorm1d_kernel, n_features=F, eps=eps)
        cost = pl.CostEstimate(
            flops=8 * B * F,                          # sub, sq, sum, muls, add (approx)
            transcendentals=2 * B,                    # per-row sqrt + reciprocal
            bytes_accessed=2 * B * F * io_bytes + 2 * F * gamma.dtype.itemsize,
        )
        return pl.pallas_call(
            kernel,
            out_shape=jax.ShapeDtypeStruct((B, F), x.dtype),
            grid_spec=pltpu.PrefetchScalarGridSpec(
                num_scalar_prefetch=0,
                grid=(nb,),
                in_specs=[
                    pl.BlockSpec((block_b, F), lambda i: (i, 0)),
                    pl.BlockSpec((1, F), lambda i: (0, 0)),   # gamma: VMEM-resident
                    pl.BlockSpec((1, F), lambda i: (0, 0)),   # beta:  VMEM-resident
                ],
                out_specs=pl.BlockSpec((block_b, F), lambda i: (i, 0)),
            ),
            compiler_params=pltpu.CompilerParams(
                dimension_semantics=("parallel",),            # rows independent
                vmem_limit_bytes=vmem_limit,
            ),
            cost_estimate=cost,
        )(x, gamma2d, beta2d)

    # --------------------- feature-blocked two-pass path ---------------------
    # Only taken when even a minimal full-F tile exceeds the VMEM budget.
    nk = pl.cdiv(F, block_f)

    stats_kernel = functools.partial(
        _stats_kernel, n_features=F, eps=eps, block_f=block_f)
    mean, rstd = pl.pallas_call(
        stats_kernel,
        out_shape=(jax.ShapeDtypeStruct((B, 1), jnp.float32),
                   jax.ShapeDtypeStruct((B, 1), jnp.float32)),
        grid_spec=pltpu.PrefetchScalarGridSpec(
            num_scalar_prefetch=0,
            grid=(nb, nk),
            in_specs=[pl.BlockSpec((block_b, block_f), lambda i, k: (i, k))],
            out_specs=(pl.BlockSpec((block_b, 1), lambda i, k: (i, 0)),
                       pl.BlockSpec((block_b, 1), lambda i, k: (i, 0))),
            scratch_shapes=[pltpu.VMEM((block_b, 1), jnp.float32),
                            pltpu.VMEM((block_b, 1), jnp.float32)],
        ),
        compiler_params=pltpu.CompilerParams(
            dimension_semantics=("parallel", "arbitrary"),
            vmem_limit_bytes=vmem_limit,
        ),
    )(x)

    return pl.pallas_call(
        _apply_kernel,
        out_shape=jax.ShapeDtypeStruct((B, F), x.dtype),
        grid_spec=pltpu.PrefetchScalarGridSpec(
            num_scalar_prefetch=0,
            grid=(nb, nk),
            in_specs=[
                pl.BlockSpec((block_b, block_f), lambda i, k: (i, k)),
                pl.BlockSpec((block_b, 1), lambda i, k: (i, 0)),
                pl.BlockSpec((block_b, 1), lambda i, k: (i, 0)),
                pl.BlockSpec((1, block_f), lambda i, k: (0, k)),
                pl.BlockSpec((1, block_f), lambda i, k: (0, k)),
            ],
            out_specs=pl.BlockSpec((block_b, block_f), lambda i, k: (i, k)),
        ),
        compiler_params=pltpu.CompilerParams(
            dimension_semantics=("parallel", "arbitrary"),
            vmem_limit_bytes=vmem_limit,
        ),
    )(x, mean, rstd, gamma2d, beta2d)


# TODO(synk): fusing this LayerNorm into its producer/consumer (residual add or
# the following matmul prologue) is the only change that can beat the HBM
# roofline; out of scope for a standalone module port.


if __name__ == "__main__":
    key = jax.random.PRNGKey(0)
    B, F = 16, 128                      # lane-dense F, sublane-aligned batch

    x = jax.random.normal(key, (B, F), dtype=jnp.float32)
    # nn.Parameter(torch.ones(features)) / torch.zeros(features)
    gamma = jnp.ones((F,), dtype=jnp.float32)
    beta = jnp.zeros((F,), dtype=jnp.float32)
    eps = 1e-6

    def ref_ln(x, gamma, beta, eps):
        mean = jnp.mean(x, axis=1, keepdims=True)
        std = jnp.sqrt(jnp.sum((x - mean) ** 2, axis=1, keepdims=True)
                       / (x.shape[1] - 1))            # unbiased, eps added to std
        return gamma * (x - mean) / (std + eps) + beta

    # Default path: single-pass, full-F blocks, grid >= 2 over the batch axis.
    out = layernorm1d(x, gamma, beta, eps)
    jax.block_until_ready(out)
    assert jnp.allclose(out, ref_ln(x, gamma, beta, eps), atol=1e-5, rtol=1e-5), \
        "mismatch vs reference (single-pass path)"

    # Exercise the feature-blocked two-pass path at a small shape by forcing
    # block_f < F — the path very-wide-F inputs would take automatically.
    B2, F2 = 24, 384
    x2 = jax.random.normal(jax.random.PRNGKey(1), (B2, F2), dtype=jnp.float32)
    g2 = jax.random.normal(jax.random.PRNGKey(2), (F2,), dtype=jnp.float32)
    b2 = jax.random.normal(jax.random.PRNGKey(3), (F2,), dtype=jnp.float32)
    out2 = layernorm1d(x2, g2, b2, eps, block_b=8, block_f=128)
    jax.block_until_ready(out2)
    assert jnp.allclose(out2, ref_ln(x2, g2, b2, eps), atol=1e-4, rtol=1e-4), \
        "mismatch vs reference (two-pass path)"

    print("KERNEL_OK")
</pallas_src>

<mosaic_0001>
module attributes {stable_mosaic.version = 11 : i64} {
  func.func @_layernorm1d_kernel(%arg0: i32, %arg1: memref<8x128xf32, #tpu.memory_space<vmem>>, %arg2: memref<1x128xf32, #tpu.memory_space<vmem>>, %arg3: memref<1x128xf32, #tpu.memory_space<vmem>>, %arg4: memref<8x128xf32, #tpu.memory_space<vmem>>) attributes {dimension_semantics = [#tpu.dimension_semantics<parallel>], iteration_bounds = array<i64: 2>, scalar_prefetch = 0 : i64, scratch_operands = 0 : i64, tpu.core_type = #tpu.core_type<tc>, window_params = [{transform_indices = @transform_0, window_bounds = array<i64: 8, 128>}, {pipeline_mode = #tpu.pipeline_mode<synchronous>, transform_indices = @transform_1, window_bounds = array<i64: 1, 128>}, {pipeline_mode = #tpu.pipeline_mode<synchronous>, transform_indices = @transform_2, window_bounds = array<i64: 1, 128>}, {transform_indices = @transform_3, window_bounds = array<i64: 8, 128>}]} {
    %c0 = arith.constant 0 : index
    %c0_0 = arith.constant 0 : index
    %0 = vector.load %arg1[%c0, %c0_0] : memref<8x128xf32, #tpu.memory_space<vmem>>, vector<8x128xf32>
    %cst = arith.constant dense<0.000000e+00> : vector<8xf32>
    %1 = vector.multi_reduction <add>, %0, %cst [1] : vector<8x128xf32> to vector<8xf32>
    %2 = vector.shape_cast %1 : vector<8xf32> to vector<8x1xf32>
    %cst_1 = arith.constant 1.280000e+02 : f32
    %3 = vector.broadcast %cst_1 : f32 to vector<8x1xf32>
    %4 = arith.divf %2, %3 : vector<8x1xf32>
    %5 = vector.broadcast %4 : vector<8x1xf32> to vector<8x128xf32>
    %6 = arith.subf %0, %5 : vector<8x128xf32>
    %7 = arith.mulf %6, %6 : vector<8x128xf32>
    %cst_2 = arith.constant dense<0.000000e+00> : vector<8xf32>
    %8 = vector.multi_reduction <add>, %7, %cst_2 [1] : vector<8x128xf32> to vector<8xf32>
    %9 = vector.shape_cast %8 : vector<8xf32> to vector<8x1xf32>
    %cst_3 = arith.constant 0.00787401571 : f32
    %10 = vector.broadcast %cst_3 : f32 to vector<8x1xf32>
    %11 = arith.mulf %9, %10 : vector<8x1xf32>
    %12 = math.sqrt %11 : vector<8x1xf32>
    %cst_4 = arith.constant 9.99999997E-7 : f32
    %13 = vector.broadcast %cst_4 : f32 to vector<8x1xf32>
    %14 = arith.addf %12, %13 : vector<8x1xf32>
    %15 = tpu.reciprocal %14 : vector<8x1xf32> -> vector<8x1xf32>
    %c0_5 = arith.constant 0 : index
    %c0_6 = arith.constant 0 : index
    %16 = vector.load %arg2[%c0_5, %c0_6] : memref<1x128xf32, #tpu.memory_space<vmem>>, vector<1x128xf32>
    %c0_7 = arith.constant 0 : index
    %c0_8 = arith.constant 0 : index
    %17 = vector.load %arg3[%c0_7, %c0_8] : memref<1x128xf32, #tpu.memory_space<vmem>>, vector<1x128xf32>
    %18 = vector.broadcast %15 : vector<8x1xf32> to vector<8x128xf32>
    %19 = arith.mulf %6, %18 : vector<8x128xf32>
    %20 = vector.broadcast %16 : vector<1x128xf32> to vector<8x128xf32>
    %21 = arith.mulf %19, %20 : vector<8x128xf32>
    %22 = vector.broadcast %17 : vector<1x128xf32> to vector<8x128xf32>
    %23 = arith.addf %21, %22 : vector<8x128xf32>
    %c0_9 = arith.constant 0 : index
    %c0_10 = arith.constant 0 : index
    %24 = vector.load %arg4[%c0_9, %c0_10] : memref<8x128xf32, #tpu.memory_space<vmem>>, vector<8x128xf32>
    tpu.vector_store %arg4[%c0_9, %c0_10], %23 {strides = array<i32>} : memref<8x128xf32, #tpu.memory_space<vmem>>, vector<8x128xf32>,
    return
  }
  func.func @transform_0(%arg0: i32) -> (i32, i32) {
    %c0_i32 = arith.constant 0 : i32
    %c0_i32_0 = arith.constant 0 : i32
    return %arg0, %c0_i32 : i32, i32
  }
  func.func @transform_1(%arg0: i32) -> (i32, i32) {
    %c0_i32 = arith.constant 0 : i32
    %c0_i32_0 = arith.constant 0 : i32
    %c0_i32_1 = arith.constant 0 : i32
    return %c0_i32, %c0_i32_0 : i32, i32
  }
  func.func @transform_2(%arg0: i32) -> (i32, i32) {
    %c0_i32 = arith.constant 0 : i32
    %c0_i32_0 = arith.constant 0 : i32
    %c0_i32_1 = arith.constant 0 : i32
    return %c0_i32, %c0_i32_0 : i32, i32
  }
  func.func @transform_3(%arg0: i32) -> (i32, i32) {
    %c0_i32 = arith.constant 0 : i32
    %c0_i32_0 = arith.constant 0 : i32
    return %arg0, %c0_i32 : i32, i32
  }
}

</mosaic_0001>

<llo_original>
// kernel: tpu_custom_call.1
$region0: #{tpu_custom_call.1}
  #allocation0 [shape = 'u32[]', space=smem, size = 0x4, offset = 0x4, fixed_abs, tag = 'smem constant byte address 0x4 - core index']
  #allocation1 [shape = 'u32[144,128]{1,0:T(1,128)}', space=vmem, size = 0x12000, scoped, tag = 'internal scratch']
  %s0 = inlined_call_operand.hbm [shape: f32[16,128], index: 0, kind: input, shape index: {}]
  %s1 = inlined_call_operand.vmem [shape: f32[1,128], index: 1, kind: input, shape index: {}]
  %s2 = inlined_call_operand.vmem [shape: f32[1,128], index: 2, kind: input, shape index: {}]
  %s3 = inlined_call_operand.hbm [shape: f32[16,128], index: 3, kind: output, shape index: {}]
  %s4 = sld [smem:[#allocation0]]
  $region49: #{tpu_custom_call.1} parent=0
    _
  %s6 = ssub.s32 1, %s4
  %s7 = scalar_select 0, %s6, %s4
  $region1: #{tpu_custom_call.1} parent=0
    #allocation2 [shape = 'u8[8192]{0}', space=vmem, size = 0x2000, scoped, tag = 'input window, operand 0']
    #allocation3 [shape = 's32[2]{0}', space=sflag, size = 0x8, scoped, tag = 'scoped memory for tpu_custom_call.1']
    #allocation4 [shape = 's32[2]{0}', space=sflag, size = 0x8, scoped, tag = 'scoped memory for tpu_custom_call.1']
    #allocation5 [shape = 'u8[8192]{0}', space=vmem, size = 0x2000, scoped, tag = 'output window, operand 0']
    %8 = vsyncpa [#allocation3], 0
    %s9 = scalar_lea.sflag [#allocation3], 1
    %10 = vsyncpa %s9, 0
    %11 = vsyncpa [#allocation4], 0
    %s12 = scalar_lea.sflag [#allocation4], 1
    %13 = vsyncpa %s12, 0
    loop: start=0, step=1, limit=4
    $region2: #{tpu_custom_call.1} parent=1 // loop_pre_header
      _
    $region3: #{tpu_custom_call.1} parent=1 // loop_header
      %s15 = sphi 0, %s19
      %p16 = scmp.ge.s32.totalorder %s15, 4
      %s25 = sphi 0, %s27
      %s28 = sphi 0, %s25
      %s29 = sphi 0, %s28
      %s45 = sphi 0, %s29
      %s49 = sphi 0, %s49
      %s51 = sphi 0, %s49
      %s52 = sphi 0, %s51
      %s66 = sphi 0, %s52
      %s70 = sphi 0, %s70
      %s72 = sphi 0, %s70
      %s73 = sphi 0, %s72
      %s87 = sphi 0, %s73
      %s93 = sphi 0, %s95
      %s96 = sphi 0, %s93
      %s97 = sphi 0, %s96
      %s113 = sphi 0, %s97
    $region4: #{tpu_custom_call.1} parent=1 // loop_header_branch
      %18 = sbr.rel (%p16) target = $region8
    $region5: #{tpu_custom_call.1} parent=1 // loop_body
      %s20 = ssub.s32 %s15, 1
      %s21 = ssub.s32 %s15, 2
      %s22 = sadd.s32 %s15, 1
      %s23 = ssub.s32 %s15, %s22
      %p24 = scmp.eq.s32.totalorder %s23, 0
      %s26 = sadd.s32 %s25, 1
      %s27 = scalar_select %p24, %s25, %s26
      %p30 = pneg %p24
      %p31 = scmp.eq.s32.totalorder %s15, 1
      %p32 = por %p30, %p31
      %p33 = scmp.ne.s32.totalorder %s25, %s28
      %p34 = scmp.eq.s32.totalorder %s15, 0
      %p35 = por %p33, %p34
      %p36 = scmp.ne.s32.totalorder %s25, %s28
      %p37 = scmp.eq.s32.totalorder %s20, 1
      %p38 = por %p36, %p37
      %p39 = scmp.ne.s32.totalorder %s28, %s29
      %p40 = scmp.eq.s32.totalorder %s20, 0
      %p41 = por %p39, %p40
      %p42 = scmp.ne.s32.totalorder %s28, %s29
      %p43 = scmp.eq.s32.totalorder %s21, 1
      %p44 = por %p42, %p43
      %p46 = scmp.ne.s32.totalorder %s29, %s45
      %p47 = scmp.eq.s32.totalorder %s21, 0
      %p48 = por %p46, %p47
      %s50 = sadd.s32 %s49, 1
      %p53 = scmp.eq.s32.totalorder %s15, 1
      %p54 = scmp.ne.s32.totalorder %s49, %s51
      %p55 = scmp.eq.s32.totalorder %s15, 0
      %p56 = por %p54, %p55
      %p57 = scmp.ne.s32.totalorder %s49, %s51
      %p58 = scmp.eq.s32.totalorder %s20, 1
      %p59 = por %p57, %p58
      %p60 = scmp.ne.s32.totalorder %s51, %s52
      %p61 = scmp.eq.s32.totalorder %s20, 0
      %p62 = por %p60, %p61
      %p63 = scmp.ne.s32.totalorder %s51, %s52
      %p64 = scmp.eq.s32.totalorder %s21, 1
      %p65 = por %p63, %p64
      %p67 = scmp.ne.s32.totalorder %s52, %s66
      %p68 = scmp.eq.s32.totalorder %s21, 0
      %p69 = por %p67, %p68
      %s71 = sadd.s32 %s70, 1
      %p74 = scmp.eq.s32.totalorder %s15, 1
      %p75 = scmp.ne.s32.totalorder %s70, %s72
      %p76 = scmp.eq.s32.totalorder %s15, 0
      %p77 = por %p75, %p76
      %p78 = scmp.ne.s32.totalorder %s70, %s72
      %p79 = scmp.eq.s32.totalorder %s20, 1
      %p80 = por %p78, %p79
      %p81 = scmp.ne.s32.totalorder %s72, %s73
      %p82 = scmp.eq.s32.totalorder %s20, 0
      %p83 = por %p81, %p82
      %p84 = scmp.ne.s32.totalorder %s72, %s73
      %p85 = scmp.eq.s32.totalorder %s21, 1
      %p86 = por %p84, %p85
      %p88 = scmp.ne.s32.totalorder %s73, %s87
      %p89 = scmp.eq.s32.totalorder %s21, 0
      %p90 = por %p88, %p89
      %s91 = ssub.s32 %s15, %s22
      %p92 = scmp.eq.s32.totalorder %s91, 0
      %s94 = sadd.s32 %s93, 1
      %s95 = scalar_select %p92, %s93, %s94
      %p98 = pneg %p92
      %p99 = scmp.eq.s32.totalorder %s15, 1
      %p100 = por %p98, %p99
      %p101 = scmp.ne.s32.totalorder %s93, %s96
      %p102 = scmp.eq.s32.totalorder %s15, 0
      %p103 = por %p101, %p102
      %p104 = scmp.ne.s32.totalorder %s93, %s96
      %p105 = scmp.eq.s32.totalorder %s20, 1
      %p106 = por %p104, %p105
      %p107 = scmp.ne.s32.totalorder %s96, %s97
      %p108 = scmp.eq.s32.totalorder %s20, 0
      %p109 = por %p107, %p108
      %p110 = scmp.ne.s32.totalorder %s96, %s97
      %p111 = scmp.eq.s32.totalorder %s21, 1
      %p112 = por %p110, %p111
      %p114 = scmp.ne.s32.totalorder %s97, %s113
      %p115 = scmp.eq.s32.totalorder %s21, 0
      %p116 = por %p114, %p115
      %p117 = scmp.le.s32.totalorder 1, %s15
      %p118 = scmp.lt.s32.totalorder %s15, 3
      %p119 = pnand %p117, %p118
      %p120 = pneg %p119
      // Predicated region
      $region9: #{tpu_custom_call.1} parent=5 // pred_check
        _
      $region10: #{tpu_custom_call.1} parent=5 // pred_check_branch
        %122 = sbr.rel (%p119) target = $region12
      $region11: #{tpu_custom_call.1} parent=5 // pred_region
        %s123 = ssub.s32 %s15, 1
        // Predicated region
        $region13: #{tpu_custom_call.1} parent=11 // pred_check
          %p124 = pneg %p62
        $region14: #{tpu_custom_call.1} parent=11 // pred_check_branch
          %126 = sbr.rel (%p124) target = $region16
        $region15: #{tpu_custom_call.1} parent=11 // pred_region
          _
        $region16: #{tpu_custom_call.1} parent=11 // pred_fallthru
          _
        // Predicated region
        $region17: #{tpu_custom_call.1} parent=11 // pred_check
          %p127 = pneg %p83
        $region18: #{tpu_custom_call.1} parent=11 // pred_check_branch
          %129 = sbr.rel (%p127) target = $region20
        $region19: #{tpu_custom_call.1} parent=11 // pred_region
          _
        $region20: #{tpu_custom_call.1} parent=11 // pred_fallthru
          _
      $region12: #{tpu_custom_call.1} parent=5 // pred_fallthru
        _
      %p130 = scmp.lt.s32.totalorder %s15, 2
      // Predicated region
      $region21: #{tpu_custom_call.1} parent=5 // pred_check
        %p131 = pneg %p130
      $region22: #{tpu_custom_call.1} parent=5 // pred_check_branch
        %133 = sbr.rel (%p131) target = $region24
      $region23: #{tpu_custom_call.1} parent=5 // pred_region
        // Predicated region
        $region25: #{tpu_custom_call.1} parent=23 // pred_check
          %p134 = pneg %p35
        $region26: #{tpu_custom_call.1} parent=23 // pred_check_branch
          %136 = sbr.rel (%p134) target = $region28
        $region27: #{tpu_custom_call.1} parent=23 // pred_region
          %s137 = sand.u32 %s25, 1
          %s138 = scalar_lea.sflag [#allocation3], %s137
          %s139 = sand.u32 %s25, 1
          %s140 = smul.addr %s139, 8
          %s141 = scalar_lea.vmem [#allocation2], %s140
          %s143 = ssub.s32 128, 128
          %144 = vsyncadd %s138, %s143
          %s145 = smul.addr %s15, 128
          %s146 = scalar_lea.hbm %s0, %s145
          %s148 = sshll.u32 %s141, 4
          %s149 = int_to_ptr.vmem [resolvable:$true] %s148
          %151 = dma.hbm_to_vmem [thread:$0]  %s146, 128, %s149, %s138
        $region28: #{tpu_custom_call.1} parent=23 // pred_fallthru
          _
      $region24: #{tpu_custom_call.1} parent=5 // pred_fallthru
        _
      %p152 = scmp.le.s32.totalorder 1, %s15
      %p153 = scmp.lt.s32.totalorder %s15, 3
      %p154 = pnand %p152, %p153
      %p155 = pneg %p154
      // Predicated region
      $region29: #{tpu_custom_call.1} parent=5 // pred_check
        _
      $region30: #{tpu_custom_call.1} parent=5 // pred_check_branch
        %157 = sbr.rel (%p154) target = $region32
      $region31: #{tpu_custom_call.1} parent=5 // pred_region
        %s158 = ssub.s32 %s15, 1
        %s159 = sand.u32 %s28, 1
        %s160 = scalar_lea.sflag [#allocation3], %s159
        %s161 = sand.u32 %s28, 1
        %s162 = smul.addr %s161, 8
        %s163 = scalar_lea.vmem [#allocation2], %s162
        // Predicated region
        $region33: #{tpu_custom_call.1} parent=31 // pred_check
          %p164 = pneg %p41
        $region34: #{tpu_custom_call.1} parent=31 // pred_check_branch
          %166 = sbr.rel (%p164) target = $region36
        $region35: #{tpu_custom_call.1} parent=31 // pred_region
          %167 = dma.done %s160, 128
        $region36: #{tpu_custom_call.1} parent=31 // pred_fallthru
          _
        %s168 = sand.u32 %s28, 1
        %s169 = scalar_lea.sflag [#allocation3], %s168
        %s170 = sand.u32 %s28, 1
        %s171 = smul.addr %s170, 8
        %s172 = scalar_lea.vmem [#allocation2], %s171
        %p173 = pneg %p41
        %p174 = pneg %p38
        %p175 = pneg %p62
        %p176 = pneg %p59
        %p177 = pneg %p83
        %p178 = pneg %p80
        %p179 = pneg %p109
        %p180 = pneg %p106
        %s181 = sand.u32 %s96, 1
        %s182 = scalar_lea.sflag [#allocation4], %s181
        %s183 = sand.u32 %s96, 1
        %s184 = smul.addr %s183, 8
        %s185 = scalar_lea.vmem [#allocation5], %s184
        %v186 = vld [vmem:[%s163] sm:$0xff]
        %187 = vadd.xlane.f32.xlu0 %v186
        %v188 = vpop.xlane.xlu0 %187
        %v189 = vrcp.pop 128.0
        %v190 = vmul.f32 %v188, %v189
        %v191 = vsub.f32 %v186, %v190
        %v192 = vmul.f32 %v191, %v191
        %193 = vadd.xlane.f32.xlu0 %v192
        %v194 = vpop.xlane.xlu0 %193
        %v195 = vmul.f32 %v194, 0.007874016
        %v196 = vrsqrt.pop %v195
        %v197 = vmul.f32 %v195, %v196
        %vm198 = vcmp.eq.f32.partialorder %v195, inf
        %v199 = vsel %vm198, %v195, %v197
        %vm200 = vcmp.eq.f32.partialorder %v195, 0.0
        %v201 = vand.u32 %v195, 2147483648
        %v202 = vsel %vm200, %v201, %v199
        %v203 = vadd.f32 %v202, 1e-06
        %v204 = vrcp.pop %v203
        %v205 = vld [vmem:[%s1] sm:$0x1]
        %v206 = vld [vmem:[%s2] sm:$0x1]
        %v207 = vmul.f32 %v191, %v204
        %v209 = vlaneseq
        %v210 = vshrl.u32 %v209, 7
        %v211 = vsub.s32 0, %v210
        %v212 = vrot.slane %v205, %v211
        %v214 = vmul.f32 %v207, %v212
        %v216 = vlaneseq
        %v217 = vshrl.u32 %v216, 7
        %v218 = vsub.s32 0, %v217
        %v219 = vrot.slane %v206, %v218
        %v221 = vadd.f32 %v214, %v219
        %222 = vst [vmem:[%s185] sm:$0xff] %v221
        %s223 = sand.u32 %s96, 1
        %s224 = scalar_lea.sflag [#allocation4], %s223
        %s225 = sand.u32 %s96, 1
        %s226 = smul.addr %s225, 8
        %s227 = scalar_lea.vmem [#allocation5], %s226
        // Predicated region
        $region37: #{tpu_custom_call.1} parent=31 // pred_check
          %p228 = pneg %p106
        $region38: #{tpu_custom_call.1} parent=31 // pred_check_branch
          %230 = sbr.rel (%p228) target = $region40
        $region39: #{tpu_custom_call.1} parent=31 // pred_region
          %s232 = ssub.s32 128, 128
          %233 = vsyncadd %s224, %s232
          %s234 = smul.addr %s20, 128
          %s235 = scalar_lea.hbm %s3, %s234
          %s237 = sshll.u32 %s227, 4
          %s238 = int_to_ptr.vmem [resolvable:$true] %s237
          %240 = dma.vmem_to_hbm [thread:$0]  %s238, 128, %s235, %s224
        $region40: #{tpu_custom_call.1} parent=31 // pred_fallthru
          _
      $region32: #{tpu_custom_call.1} parent=5 // pred_fallthru
        _
      %p241 = scmp.le.s32.totalorder 2, %s15
      // Predicated region
      $region41: #{tpu_custom_call.1} parent=5 // pred_check
        %p242 = pneg %p241
      $region42: #{tpu_custom_call.1} parent=5 // pred_check_branch
        %244 = sbr.rel (%p242) target = $region44
      $region43: #{tpu_custom_call.1} parent=5 // pred_region
        %s245 = ssub.s32 %s15, 2
        // Predicated region
        $region45: #{tpu_custom_call.1} parent=43 // pred_check
          %p246 = pneg %p112
        $region46: #{tpu_custom_call.1} parent=43 // pred_check_branch
          %248 = sbr.rel (%p246) target = $region48
        $region47: #{tpu_custom_call.1} parent=43 // pred_region
          %s249 = sand.u32 %s97, 1
          %s250 = scalar_lea.sflag [#allocation4], %s249
          %s251 = sand.u32 %s97, 1
          %s252 = smul.addr %s251, 8
          %s253 = scalar_lea.vmem [#allocation5], %s252
          %254 = dma.done %s250, 128
        $region48: #{tpu_custom_call.1} parent=43 // pred_fallthru
          _
      $region44: #{tpu_custom_call.1} parent=5 // pred_fallthru
        _
    $region6: #{tpu_custom_call.1} parent=1 // loop_footer
      %s19 = sadd.s32 1, %s15
    $region7: #{tpu_custom_call.1} parent=1 // loop_footer_branch
      %14 = sbr.rel target = $region3
    $region8: #{tpu_custom_call.1} parent=1 // loop_exit
      _
    %255 = vsyncpa [#allocation3], 1
    %s256 = scalar_lea.sflag [#allocation3], 1
    %257 = vsyncpa %s256, 1
    %258 = vsyncpa [#allocation4], 1
    %s259 = scalar_lea.sflag [#allocation4], 1
    %260 = vsyncpa %s259, 1

</llo_original>
